<compile_context>
chip_gen: v6e
topology: v6e:2x2x1
jax: 0.10.0
libtpu: 0.0.40
codegen_flags: <defaults>
</compile_context>

<pallas_src>
from functools import partial

import jax
import jax.numpy as jnp
from jax.experimental import pallas as pl
from jax.experimental.pallas import tpu as pltpu


def _ce2d_kernel(x_ref, t_ref, o_ref, acc_ref, *, n_pixels, tile,
                 tiles_per_split, inv_p, has_tail):
    j = pl.program_id(2)                       # pixel-tile axis (innermost)

    @pl.when(j == 0)
    def _():
        acc_ref[...] = jnp.zeros_like(acc_ref)

    x = x_ref[...].astype(jnp.float32)         # (Bn, C, T) channels on sublanes
    t = t_ref[...].astype(jnp.int32)           # (Bn, 1, T) targets (int8/int32 in HBM)

    # numerically stable log-softmax over the channel (sublane) axis, without
    # materializing the full (C, T) log-prob tensor.
    m = jnp.max(x, axis=1, keepdims=True)                          # (Bn, 1, T)
    z = x - m                                                      # (Bn, C, T)
    lse = jnp.log(jnp.sum(jnp.exp(z), axis=1, keepdims=True))      # (Bn, 1, T)

    # gather z at the target class via a sublane one-hot select + reduce
    ch = jax.lax.broadcasted_iota(jnp.int32, x.shape, 1)           # (Bn, C, T)
    z_t = jnp.sum(jnp.where(ch == t, z, 0.0), axis=1, keepdims=True)
    picked = z_t - lse                                             # logp[target]

    # NLLLoss(weight=None, reduction='none', ignore_index=-1): ignored pixels
    # contribute 0 but still count in the denominator of the later mean.
    # Keep this a select (not mask-multiply) so OOB-tail NaN/Inf never enters
    # the accumulator.
    valid = t != -1
    if has_tail:
        # only emitted when P % T != 0 (static specialization)
        s = pl.program_id(0)
        lane = jax.lax.broadcasted_iota(jnp.int32, t.shape, 2)     # (Bn, 1, T)
        gtile = s * tiles_per_split + j
        valid = valid & ((gtile * tile + lane) < n_pixels)
    acc_ref[...] += jnp.where(valid, -picked, 0.0)                 # (Bn, 1, T)

    @pl.when(j == pl.num_programs(2) - 1)
    def _():
        # loss.mean(dim=2).mean(dim=1) == sum(loss) / (H*W) (equal-sized rows)
        total = jnp.sum(acc_ref[...], axis=2, keepdims=True) * inv_p   # (Bn,1,1)
        o_ref[...] = jnp.broadcast_to(total, o_ref.shape)              # lane-dense


def cross_entropy_loss_2d(inputs_nchw, targets_nhw, *, vmem_budget_bytes=20 * 2**20):
    """inputs_nchw: (N, C, H, W) float logits (f32 or bf16; up-cast in-kernel);
    targets_nhw: (N, H, W) int class ids in [-1, C) with -1 = ignore.
    Returns (N,) float32, matching the PyTorch module's forward."""
    N, C, H, W = inputs_nchw.shape
    P = H * W

    # free, contiguous reshapes -- no transpose, no wrapper-side logit cast
    x = inputs_nchw.reshape(N, C, P)
    x_bytes = jnp.dtype(inputs_nchw.dtype).itemsize
    t_dtype = jnp.int8 if C <= 127 else jnp.int32   # shrink target stream
    t_bytes = jnp.dtype(t_dtype).itemsize
    t = targets_nhw.astype(t_dtype).reshape(N, 1, P)

    # ---- adaptive pixel tile: biggest T (multiple of 128) within the budget.
    # per-pixel working set: double-buffered logits + targets + f32 accumulator
    per_pixel = 2 * C * x_bytes + 2 * t_bytes + 4
    t_cap = max(128, min(65536, (vmem_budget_bytes // per_pixel) // 128 * 128))

    if P <= t_cap:
        # whole pixel extent per block; batch samples to amortize step overhead
        T = P
        num_tiles = 1
        per_sample = per_pixel * P
        Bn = 1
        for cand in (16, 8, 4, 2):
            if N % cand == 0 and cand * per_sample <= vmem_budget_bytes:
                Bn = cand
                break
    else:
        T = t_cap
        num_tiles = pl.cdiv(P, T)
        Bn = 1

    # ---- megacore: when N gives no parallelism, split the pixel-tile range
    # across a leading size-2 "parallel" axis (two partial sums per sample).
    S = 2 if (N // Bn == 1 and num_tiles >= 4 and num_tiles % 2 == 0) else 1
    tiles_per_split = num_tiles // S
    has_tail = (P % T) != 0
    inv_p = 1.0 / float(P)

    # ---- explicit scoped-VMEM limit: enough for the working set + headroom,
    # capped below v7x's 64 MiB physical (and >= the default scoped limits).
    usage = 2 * Bn * C * T * x_bytes + 2 * Bn * T * t_bytes + Bn * T * 4 + S * N * 512
    vmem_limit = int(min(56 * 2**20, max(32 * 2**20, usage + 8 * 2**20)))

    kernel = partial(_ce2d_kernel, n_pixels=P, tile=T,
                     tiles_per_split=tiles_per_split, inv_p=inv_p,
                     has_tail=has_tail)

    out = pl.pallas_call(
        kernel,
        out_shape=jax.ShapeDtypeStruct((S, N, 1, 128), jnp.float32),
        grid_spec=pltpu.PrefetchScalarGridSpec(
            num_scalar_prefetch=0,
            grid=(S, N // Bn, tiles_per_split),
            in_specs=[
                pl.BlockSpec((Bn, C, T),
                             lambda s, n, j: (n, 0, s * tiles_per_split + j)),
                pl.BlockSpec((Bn, 1, T),
                             lambda s, n, j: (n, 0, s * tiles_per_split + j)),
            ],
            # per-sample scalar, resident across the pixel axis, written once
            # in the epilogue as a lane-dense 128-wide tile
            out_specs=pl.BlockSpec((1, Bn, 1, 128), lambda s, n, j: (s, n, 0, 0)),
            scratch_shapes=[pltpu.VMEM((Bn, 1, T), jnp.float32)],
        ),
        compiler_params=pltpu.CompilerParams(
            dimension_semantics=("parallel", "parallel", "arbitrary"),
            vmem_limit_bytes=vmem_limit),
    )(x, t)
    # sum the (at most 2) per-core partial means -> (N,)
    return out[:, :, 0, 0].sum(axis=0)


if __name__ == "__main__":
    key = jax.random.PRNGKey(0)

    def reference(inputs, targets):
        C = inputs.shape[1]
        logp = jax.nn.log_softmax(inputs.astype(jnp.float32), axis=1)
        tc = jnp.clip(targets, 0, C - 1)
        picked = jnp.take_along_axis(logp, tc[:, None, :, :], axis=1)[:, 0]
        nll = jnp.where(targets != -1, -picked, 0.0)
        return nll.mean(axis=2).mean(axis=1)

    # 1) baseline: small images -> sample-batched blocks, int8 targets
    k1, k2 = jax.random.split(key)
    N, C, H, W = 2, 4, 16, 16
    inputs = jax.random.normal(k1, (N, C, H, W), dtype=jnp.float32)
    targets = jax.random.randint(k2, (N, H, W), minval=-1, maxval=C, dtype=jnp.int32)
    loss = cross_entropy_loss_2d(inputs, targets)
    jax.block_until_ready(loss)
    assert jnp.allclose(loss, reference(inputs, targets), atol=1e-5, rtol=1e-5), loss

    # 2) tiled pixel axis with a ragged tail + bf16 logits (forced small budget)
    k3, k4 = jax.random.split(k1)
    N, C, H, W = 2, 4, 15, 15
    x2 = jax.random.normal(k3, (N, C, H, W), dtype=jnp.float32).astype(jnp.bfloat16)
    t2 = jax.random.randint(k4, (N, H, W), minval=-1, maxval=C, dtype=jnp.int32)
    loss2 = cross_entropy_loss_2d(x2, t2, vmem_budget_bytes=4864)
    jax.block_until_ready(loss2)
    assert jnp.allclose(loss2, reference(x2.astype(jnp.float32), t2),
                        atol=1e-5, rtol=1e-5), loss2

    # 3) N == 1: pixel-tile range split across the leading parallel axis
    k5, k6 = jax.random.split(k3)
    N, C, H, W = 1, 4, 32, 32
    x3 = jax.random.normal(k5, (N, C, H, W), dtype=jnp.float32)
    t3 = jax.random.randint(k6, (N, H, W), minval=-1, maxval=C, dtype=jnp.int32)
    loss3 = cross_entropy_loss_2d(x3, t3, vmem_budget_bytes=4864)
    jax.block_until_ready(loss3)
    assert jnp.allclose(loss3, reference(x3, t3), atol=1e-5, rtol=1e-5), loss3

    print("KERNEL_OK")
</pallas_src>

<mosaic_0001>
module attributes {stable_mosaic.version = 11 : i64} {
  func.func @_ce2d_kernel(%arg0: i32, %arg1: i32, %arg2: i32, %arg3: memref<2x4x256xf32, #tpu.memory_space<vmem>>, %arg4: memref<2x1x256xi8, #tpu.memory_space<vmem>>, %arg5: memref<1x2x1x128xf32, #tpu.memory_space<vmem>>, %arg6: memref<2x1x256xf32, #tpu.memory_space<vmem>>) attributes {dimension_semantics = [#tpu.dimension_semantics<parallel>, #tpu.dimension_semantics<parallel>, #tpu.dimension_semantics<arbitrary>], iteration_bounds = array<i64: 1, 1, 1>, scalar_prefetch = 0 : i64, scratch_operands = 1 : i64, tpu.core_type = #tpu.core_type<tc>, window_params = [{transform_indices = @transform_0, window_bounds = array<i64: 2, 4, 256>}, {transform_indices = @transform_1, window_bounds = array<i64: 2, 1, 256>}, {transform_indices = @transform_2, window_bounds = array<i64: 1, 2, 1, 128>}]} {
    %c0_i32 = arith.constant 0 : i32
    %0 = arith.cmpi eq, %arg2, %c0_i32 : i32
    %1 = arith.extui %0 : i1 to i32
    %c0_i32_0 = arith.constant 0 : i32
    %2 = arith.cmpi ne, %1, %c0_i32_0 : i32
    scf.if %2 {
      %cst_19 = arith.constant 0.000000e+00 : f32
      %34 = vector.broadcast %cst_19 : f32 to vector<2x1x256xf32>
      %c0_20 = arith.constant 0 : index
      %c0_21 = arith.constant 0 : index
      %c0_22 = arith.constant 0 : index
      %35 = vector.load %arg6[%c0_20, %c0_21, %c0_22] : memref<2x1x256xf32, #tpu.memory_space<vmem>>, vector<2x1x256xf32>
      tpu.vector_store %arg6[%c0_20, %c0_21, %c0_22], %34 {strides = array<i32>} : memref<2x1x256xf32, #tpu.memory_space<vmem>>, vector<2x1x256xf32>,
    } else {
    }
    %c0 = arith.constant 0 : index
    %c0_1 = arith.constant 0 : index
    %c0_2 = arith.constant 0 : index
    %3 = vector.load %arg3[%c0, %c0_1, %c0_2] : memref<2x4x256xf32, #tpu.memory_space<vmem>>, vector<2x4x256xf32>
    %c0_3 = arith.constant 0 : index
    %c0_4 = arith.constant 0 : index
    %c0_5 = arith.constant 0 : index
    %4 = vector.load %arg4[%c0_3, %c0_4, %c0_5] : memref<2x1x256xi8, #tpu.memory_space<vmem>>, vector<2x1x256xi8>
    %5 = arith.extsi %4 : vector<2x1x256xi8> to vector<2x1x256xi32>
    %cst = arith.constant dense<0xFF800000> : vector<2x256xf32>
    %6 = vector.multi_reduction <maximumf>, %3, %cst [1] : vector<2x4x256xf32> to vector<2x256xf32>
    %7 = vector.shape_cast %6 : vector<2x256xf32> to vector<2x1x256xf32>
    %8 = vector.broadcast %7 : vector<2x1x256xf32> to vector<2x4x256xf32>
    %9 = arith.subf %3, %8 : vector<2x4x256xf32>
    %10 = math.exp %9 : vector<2x4x256xf32>
    %cst_6 = arith.constant dense<0.000000e+00> : vector<2x256xf32>
    %11 = vector.multi_reduction <add>, %10, %cst_6 [1] : vector<2x4x256xf32> to vector<2x256xf32>
    %12 = vector.shape_cast %11 : vector<2x256xf32> to vector<2x1x256xf32>
    %13 = math.log %12 : vector<2x1x256xf32>
    %14 = tpu.iota {dimensions = array<i32: 1>} : vector<2x4x256xi32>
    %15 = vector.broadcast %5 : vector<2x1x256xi32> to vector<2x4x256xi32>
    %16 = arith.cmpi eq, %14, %15 : vector<2x4x256xi32>
    %cst_7 = arith.constant 0.000000e+00 : f32
    %17 = vector.broadcast %cst_7 : f32 to vector<2x4x256xf32>
    %18 = arith.select %16, %9, %17 : vector<2x4x256xi1>, vector<2x4x256xf32>
    %cst_8 = arith.constant dense<0.000000e+00> : vector<2x256xf32>
    %19 = vector.multi_reduction <add>, %18, %cst_8 [1] : vector<2x4x256xf32> to vector<2x256xf32>
    %20 = vector.shape_cast %19 : vector<2x256xf32> to vector<2x1x256xf32>
    %21 = arith.subf %20, %13 : vector<2x1x256xf32>
    %c-1_i32 = arith.constant -1 : i32
    %22 = vector.broadcast %c-1_i32 : i32 to vector<2x1x256xi32>
    %23 = arith.cmpi ne, %5, %22 : vector<2x1x256xi32>
    %c0_9 = arith.constant 0 : index
    %c0_10 = arith.constant 0 : index
    %c0_11 = arith.constant 0 : index
    %24 = vector.load %arg6[%c0_9, %c0_10, %c0_11] : memref<2x1x256xf32, #tpu.memory_space<vmem>>, vector<2x1x256xf32>
    %cst_12 = arith.constant 0.000000e+00 : f32
    %25 = vector.broadcast %cst_12 : f32 to vector<2x1x256xf32>
    %26 = arith.subf %25, %21 : vector<2x1x256xf32>
    %cst_13 = arith.constant 0.000000e+00 : f32
    %27 = vector.broadcast %cst_13 : f32 to vector<2x1x256xf32>
    %28 = arith.select %23, %26, %27 : vector<2x1x256xi1>, vector<2x1x256xf32>
    %29 = arith.addf %24, %28 : vector<2x1x256xf32>
    %c0_14 = arith.constant 0 : index
    %c0_15 = arith.constant 0 : index
    %c0_16 = arith.constant 0 : index
    %30 = vector.load %arg6[%c0_14, %c0_15, %c0_16] : memref<2x1x256xf32, #tpu.memory_space<vmem>>, vector<2x1x256xf32>
    tpu.vector_store %arg6[%c0_14, %c0_15, %c0_16], %29 {strides = array<i32>} : memref<2x1x256xf32, #tpu.memory_space<vmem>>, vector<2x1x256xf32>,
    %c0_i32_17 = arith.constant 0 : i32
    %31 = arith.cmpi eq, %arg2, %c0_i32_17 : i32
    %32 = arith.extui %31 : i1 to i32
    %c0_i32_18 = arith.constant 0 : i32
    %33 = arith.cmpi ne, %32, %c0_i32_18 : i32
    scf.if %33 {
      %c0_19 = arith.constant 0 : index
      %c0_20 = arith.constant 0 : index
      %c0_21 = arith.constant 0 : index
      %34 = vector.load %arg6[%c0_19, %c0_20, %c0_21] : memref<2x1x256xf32, #tpu.memory_space<vmem>>, vector<2x1x256xf32>
      %cst_22 = arith.constant dense<0.000000e+00> : vector<2x1xf32>
      %35 = vector.multi_reduction <add>, %34, %cst_22 [2] : vector<2x1x256xf32> to vector<2x1xf32>
      %36 = vector.shape_cast %35 : vector<2x1xf32> to vector<2x1x1xf32>
      %cst_23 = arith.constant 3.906250e-03 : f32
      %37 = vector.broadcast %cst_23 : f32 to vector<2x1x1xf32>
      %38 = arith.mulf %36, %37 : vector<2x1x1xf32>
      %39 = vector.shape_cast %38 : vector<2x1x1xf32> to vector<1x2x1x1xf32>
      %40 = vector.broadcast %39 : vector<1x2x1x1xf32> to vector<1x2x1x128xf32>
      %c0_24 = arith.constant 0 : index
      %c0_25 = arith.constant 0 : index
      %c0_26 = arith.constant 0 : index
      %c0_27 = arith.constant 0 : index
      %41 = vector.load %arg5[%c0_24, %c0_25, %c0_26, %c0_27] : memref<1x2x1x128xf32, #tpu.memory_space<vmem>>, vector<1x2x1x128xf32>
      tpu.vector_store %arg5[%c0_24, %c0_25, %c0_26, %c0_27], %40 {strides = array<i32>} : memref<1x2x1x128xf32, #tpu.memory_space<vmem>>, vector<1x2x1x128xf32>,
    } else {
    }
    return
  }
  func.func @transform_0(%arg0: i32, %arg1: i32, %arg2: i32) -> (i32, i32, i32) {
    %c1_i32 = arith.constant 1 : i32
    %0 = arith.muli %arg0, %c1_i32 : i32
    %1 = arith.addi %0, %arg2 : i32
    %c0_i32 = arith.constant 0 : i32
    %c0_i32_0 = arith.constant 0 : i32
    return %arg1, %c0_i32, %1 : i32, i32, i32
  }
  func.func @transform_1(%arg0: i32, %arg1: i32, %arg2: i32) -> (i32, i32, i32) {
    %c1_i32 = arith.constant 1 : i32
    %0 = arith.muli %arg0, %c1_i32 : i32
    %1 = arith.addi %0, %arg2 : i32
    %c0_i32 = arith.constant 0 : i32
    %c0_i32_0 = arith.constant 0 : i32
    return %arg1, %c0_i32, %1 : i32, i32, i32
  }
  func.func @transform_2(%arg0: i32, %arg1: i32, %arg2: i32) -> (i32, i32, i32, i32) {
    %c0_i32 = arith.constant 0 : i32
    %c0_i32_0 = arith.constant 0 : i32
    %c0_i32_1 = arith.constant 0 : i32
    return %arg0, %arg1, %c0_i32, %c0_i32_0 : i32, i32, i32, i32
  }
}

</mosaic_0001>

<llo_original>
// kernel: tpu_custom_call.1
$region0: #{tpu_custom_call.1}
  #allocation0 [shape = 'u32[]', space=smem, size = 0x4, offset = 0x4, fixed_abs, tag = 'smem constant byte address 0x4 - core index']
  #allocation1 [shape = 'u32[144,128]{1,0:T(1,128)}', space=vmem, size = 0x12000, scoped, tag = 'internal scratch']
  #allocation2 [shape = 'f32[2,1,256]{2,1,0:T(1,128)}', space=vmem, size = 0x800, scoped, tag = 'scratch operand']
  %s0 = inlined_call_operand.hbm [shape: f32[2,4,256], index: 0, kind: input, shape index: {}]
  %s1 = inlined_call_operand.vmem [shape: s8[2,1,256], index: 1, kind: input, shape index: {}]
  %s2 = inlined_call_operand.hbm [shape: f32[1,2,1,128], index: 2, kind: output, shape index: {}]
  %s3 = sld [smem:[#allocation0]]
  $region30: #{tpu_custom_call.1} parent=0
    _
  %s5 = ssub.s32 1, %s3
  %s6 = scalar_select 0, %s5, %s3
  $region1: #{tpu_custom_call.1} parent=0
    #allocation3 [shape = 'u8[8192]{0}', space=vmem, size = 0x2000, scoped, tag = 'input window, operand 0, single buffered']
    #allocation4 [shape = 's32[1]{0}', space=sflag, size = 0x4, scoped, tag = 'scoped memory for tpu_custom_call.1']
    #allocation5 [shape = 's32[1]{0}', space=sflag, size = 0x4, scoped, tag = 'scoped memory for tpu_custom_call.1']
    #allocation6 [shape = 'u8[1024]{0}', space=vmem, size = 0x400, scoped, tag = 'output window, operand 0, single buffered']
    %7 = vsyncpa [#allocation4], 0
    %8 = vsyncpa [#allocation5], 0
    // Predicated region
    $region2: #{tpu_custom_call.1} parent=1 // pred_check
      _
    $region3: #{tpu_custom_call.1} parent=1 // pred_check_branch
      %10 = sbr.rel (0) target = $region5
    $region4: #{tpu_custom_call.1} parent=1 // pred_region
      %s11 = sadd.s32 0, 0
      %s12 = smul.u32 2, %s11
      %s14 = ssub.s32 256, 256
      %15 = vsyncadd [#allocation4], %s14
      %s16 = smul.addr %s12, 64
      %s17 = scalar_lea.hbm %s0, %s16
      %s18 = sshll.u32 [#allocation3], 4
      %s19 = int_to_ptr.vmem [resolvable:$true] %s18
      %24 = dma.hbm_to_vmem [thread:$0]  %s17, 256, %s19, [#allocation4], 128, 128, 8
    $region5: #{tpu_custom_call.1} parent=1 // pred_fallthru
      _
    // Predicated region
    $region6: #{tpu_custom_call.1} parent=1 // pred_check
      _
    $region7: #{tpu_custom_call.1} parent=1 // pred_check_branch
      %26 = sbr.rel (0) target = $region9
    $region8: #{tpu_custom_call.1} parent=1 // pred_region
      %s27 = sadd.s32 0, 0
      %s28 = smul.u32 2, %s27
      %p29 = scmp.lt.s32.totalorder %s28, 1
      %s30 = scalar_select %p29, %s28, 1
      %s31 = scalar_lea.vmem %s1, %s30
      %s32 = sadd.s32 0, 0
      %s33 = smul.u32 2, %s32
    $region9: #{tpu_custom_call.1} parent=1 // pred_fallthru
      _
    // Predicated region
    $region10: #{tpu_custom_call.1} parent=1 // pred_check
      _
    $region11: #{tpu_custom_call.1} parent=1 // pred_check_branch
      %35 = sbr.rel (0) target = $region13
    $region12: #{tpu_custom_call.1} parent=1 // pred_region
      %36 = dma.done [#allocation4], 256
    $region13: #{tpu_custom_call.1} parent=1 // pred_fallthru
      _
    %s37 = sadd.s32 0, 0
    %s38 = smul.u32 2, %s37
    %p39 = scmp.lt.s32.totalorder %s38, 1
    %s40 = scalar_select %p39, %s38, 1
    %s41 = scalar_lea.vmem %s1, %s40
    %s42 = sadd.s32 0, 0
    %s43 = smul.u32 2, %s42
    %s44 = sadd.s32 0, 0
    %s45 = smul.u32 2, %s44
    %p46 = scmp.lt.s32.totalorder %s45, 1
    %s47 = scalar_select %p46, %s45, 1
    %s48 = scalar_lea.vmem %s1, %s47
    %s49 = sadd.s32 0, 0
    %s50 = smul.u32 2, %s49
    %p51 = scmp.eq.s32.totalorder 0, 0
    // Predicated region
    $region14: #{tpu_custom_call.1} parent=1 // pred_check
      %p52 = pneg %p51
    $region15: #{tpu_custom_call.1} parent=1 // pred_check_branch
      %54 = sbr.rel (%p52) target = $region17
    $region16: #{tpu_custom_call.1} parent=1 // pred_region
      %v55 = vlaneseq
      %vm56 = vcmp.ge.s32.totalorder %v55, 0
      %vm57 = vcmp.lt.s32.totalorder %v55, 256
      %vm58 = vmand %vm56, %vm57
      %59 = vst.msk [vmem:[#allocation2] sm:$0x3] %vm58, 0.0
      %60 = vst.msk [vmem:[#allocation2 + $0x2] sm:$0x3] %vm58, 0.0
    $region17: #{tpu_custom_call.1} parent=1 // pred_fallthru
      _
    %v61 = vld [vmem:[#allocation3] sm:$0xff]
    %v62 = vld [vmem:[#allocation3 + $0x8] sm:$0xff]
    %v63 = vld [vmem:[%s48] sm:$0x3]
    %v64 = vld [vmem:[%s48 + $0x2] sm:$0x3]
    %v65 = vunpack.c.0.s8 %v63
    %v66 = vunpack.c.0.s8 %v64
    %v69 = vcombine.high %v61, %v61
    %v70 = vcombine.high %v62, %v62
    %vm73 = vcmask 1043456
    %v74 = vsel %vm73, %v61, -inf
    %v75 = vrot.slane %v74, 4
    %v76 = vmax.f32 %v74, %v75
    %v77 = vrot.slane %v76, 2
    %v78 = vmax.f32 %v76, %v77
    %v79 = vrot.slane %v78, 1
    %v80 = vmax.f32 %v78, %v79
    %v81 = vsel %vm73, %v69, -inf
    %v82 = vrot.slane %v81, 4
    %v83 = vmax.f32 %v81, %v82
    %v84 = vrot.slane %v83, 2
    %v85 = vmax.f32 %v83, %v84
    %v86 = vrot.slane %v85, 1
    %v87 = vmax.f32 %v85, %v86
    %v88 = vsel %vm73, %v62, -inf
    %v89 = vrot.slane %v88, 4
    %v90 = vmax.f32 %v88, %v89
    %v91 = vrot.slane %v90, 2
    %v92 = vmax.f32 %v90, %v91
    %v93 = vrot.slane %v92, 1
    %v94 = vmax.f32 %v92, %v93
    %v95 = vsel %vm73, %v70, -inf
    %v96 = vrot.slane %v95, 4
    %v97 = vmax.f32 %v95, %v96
    %v98 = vrot.slane %v97, 2
    %v99 = vmax.f32 %v97, %v98
    %v100 = vrot.slane %v99, 1
    %v101 = vmax.f32 %v99, %v100
    %v106 = vcombine.low %v80, %v87
    %v107 = vcombine.low %v94, %v101
    %v110 = vsub.f32 %v61, %v106
    %v111 = vsub.f32 %v62, %v107
    %v112 = vmul.f32 %v110, 1.442695
    %v113 = vpow.pop %v112
    %v114 = vmul.f32 %v111, 1.442695
    %v115 = vpow.pop %v114
    %v118 = vcombine.high %v113, %v113
    %v119 = vcombine.high %v115, %v115
    %v122 = vsel %vm73, %v113, 0.0
    %v123 = vrot.slane %v122, 4
    %v124 = vadd.f32 %v122, %v123
    %v125 = vrot.slane %v124, 2
    %v126 = vadd.f32 %v124, %v125
    %v127 = vrot.slane %v126, 1
    %v128 = vadd.f32 %v126, %v127
    %v129 = vsel %vm73, %v118, 0.0
    %v130 = vrot.slane %v129, 4
    %v131 = vadd.f32 %v129, %v130
    %v132 = vrot.slane %v131, 2
    %v133 = vadd.f32 %v131, %v132
    %v134 = vrot.slane %v133, 1
    %v135 = vadd.f32 %v133, %v134
    %v136 = vsel %vm73, %v115, 0.0
    %v137 = vrot.slane %v136, 4
    %v138 = vadd.f32 %v136, %v137
    %v139 = vrot.slane %v138, 2
    %v140 = vadd.f32 %v138, %v139
    %v141 = vrot.slane %v140, 1
    %v142 = vadd.f32 %v140, %v141
    %v143 = vsel %vm73, %v119, 0.0
    %v144 = vrot.slane %v143, 4
    %v145 = vadd.f32 %v143, %v144
    %v146 = vrot.slane %v145, 2
    %v147 = vadd.f32 %v145, %v146
    %v148 = vrot.slane %v147, 1
    %v149 = vadd.f32 %v147, %v148
    %v150 = vlog2.pop %v128
    %v151 = vmul.f32 %v150, 0.6931472
    %v152 = vlog2.pop %v135
    %v153 = vmul.f32 %v152, 0.6931472
    %v154 = vlog2.pop %v142
    %v155 = vmul.f32 %v154, 0.6931472
    %v156 = vlog2.pop %v149
    %v157 = vmul.f32 %v156, 0.6931472
    %v158 = vlaneseq
    %v159 = vshrl.u32 %v158, 7
    %v160 = vlaneseq
    %v161 = vshrl.u32 %v160, 7
    %v162 = vsub.s32 0, %v161
    %v163 = vrot.slane %v65, %v162
    %v164 = vlaneseq
    %v165 = vshrl.u32 %v164, 7
    %v166 = vsub.s32 4, %v165
    %v167 = vrot.slane %v65, %v166
    %v168 = vlaneseq
    %v169 = vshrl.u32 %v168, 7
    %v170 = vsub.s32 0, %v169
    %v171 = vrot.slane %v66, %v170
    %v172 = vlaneseq
    %v173 = vshrl.u32 %v172, 7
    %v174 = vsub.s32 4, %v173
    %v175 = vrot.slane %v66, %v174
    %v176 = vlaneseq
    %v177 = vshrl.u32 %v176, 7
    %v178 = vsub.s32 0, %v177
    %v179 = vrot.slane %v163, %v178
    %v180 = vlaneseq
    %v181 = vshrl.u32 %v180, 7
    %v182 = vsub.s32 0, %v181
    %v183 = vrot.slane %v167, %v182
    %v184 = vlaneseq
    %v185 = vshrl.u32 %v184, 7
    %v186 = vsub.s32 0, %v185
    %v187 = vrot.slane %v171, %v186
    %v188 = vlaneseq
    %v189 = vshrl.u32 %v188, 7
    %v190 = vsub.s32 0, %v189
    %v191 = vrot.slane %v175, %v190
    %vm192 = vcmp.eq.s32.totalorder %v159, %v179
    %vm193 = vcmp.eq.s32.totalorder %v159, %v183
    %vm194 = vcmp.eq.s32.totalorder %v159, %v187
    %vm195 = vcmp.eq.s32.totalorder %v159, %v191
    %v198 = vcombine.high %v110, %v110
    %v199 = vcombine.high %v111, %v111
    %v202 = vsel %vm192, %v110, 0.0
    %v203 = vsel %vm193, %v198, 0.0
    %v204 = vsel %vm194, %v111, 0.0
    %v205 = vsel %vm195, %v199, 0.0
    %v206 = vsel %vm73, %v202, 0.0
    %v207 = vrot.slane %v206, 4
    %v208 = vadd.f32 %v206, %v207
    %v209 = vrot.slane %v208, 2
    %v210 = vadd.f32 %v208, %v209
    %v211 = vrot.slane %v210, 1
    %v212 = vadd.f32 %v210, %v211
    %v213 = vsel %vm73, %v203, 0.0
    %v214 = vrot.slane %v213, 4
    %v215 = vadd.f32 %v213, %v214
    %v216 = vrot.slane %v215, 2
    %v217 = vadd.f32 %v215, %v216
    %v218 = vrot.slane %v217, 1
    %v219 = vadd.f32 %v217, %v218
    %v220 = vsel %vm73, %v204, 0.0
    %v221 = vrot.slane %v220, 4
    %v222 = vadd.f32 %v220, %v221
    %v223 = vrot.slane %v222, 2
    %v224 = vadd.f32 %v222, %v223
    %v225 = vrot.slane %v224, 1
    %v226 = vadd.f32 %v224, %v225
    %v227 = vsel %vm73, %v205, 0.0
    %v228 = vrot.slane %v227, 4
    %v229 = vadd.f32 %v227, %v228
    %v230 = vrot.slane %v229, 2
    %v231 = vadd.f32 %v229, %v230
    %v232 = vrot.slane %v231, 1
    %v233 = vadd.f32 %v231, %v232
    %v234 = vsub.f32 %v212, %v151
    %v235 = vsub.f32 %v219, %v153
    %v236 = vsub.f32 %v226, %v155
    %v237 = vsub.f32 %v233, %v157
    %vm238 = vcmp.ne.s32.totalorder %v65, 4294967295
    %vm239 = vcmp.ne.s32.totalorder %v66, 4294967295
    %v240 = vld [vmem:[#allocation2] sm:$0x3]
    %v241 = vld [vmem:[#allocation2 + $0x2] sm:$0x3]
    %v242 = vsub.f32 0.0, %v234
    %v243 = vsub.f32 0.0, %v235
    %v244 = vsub.f32 0.0, %v236
    %v245 = vsub.f32 0.0, %v237
    %v250 = vcombine.low %v242, %v243
    %v251 = vcombine.low %v244, %v245
    %v254 = vsel %vm238, %v250, 0.0
    %v255 = vsel %vm239, %v251, 0.0
    %v259 = vunpack.c.l.s4 1966171168
    %v260 = vunpack.c.0.s8 %v259
    %v261 = vlaneseq
    %v262 = vshrl.u32 %v261, 7
    %v263 = vsub.s32 %v260, %v262
    %v264 = vrot.slane %v254, %v263
    %v266 = vunpack.c.l.s4 1966171168
    %v267 = vunpack.c.0.s8 %v266
    %v268 = vlaneseq
    %v269 = vshrl.u32 %v268, 7
    %v270 = vsub.s32 %v267, %v269
    %v271 = vrot.slane %v264, %v270
    %v273 = vunpack.c.l.s4 1966171168
    %v274 = vunpack.c.0.s8 %v273
    %v275 = vlaneseq
    %v276 = vshrl.u32 %v275, 7
    %v277 = vsub.s32 %v274, %v276
    %v278 = vrot.slane %v255, %v277
    %v280 = vunpack.c.l.s4 1966171168
    %v281 = vunpack.c.0.s8 %v280
    %v282 = vlaneseq
    %v283 = vshrl.u32 %v282, 7
    %v284 = vsub.s32 %v281, %v283
    %v285 = vrot.slane %v278, %v284
    %v288 = vadd.f32 %v240, %v271
    %v289 = vadd.f32 %v241, %v285
    %v290 = vlaneseq
    %vm291 = vcmp.ge.s32.totalorder %v290, 0
    %vm292 = vcmp.lt.s32.totalorder %v290, 256
    %vm293 = vmand %vm291, %vm292
    %294 = vst.msk [vmem:[#allocation2] sm:$0x3] %vm293, %v288
    %295 = vst.msk [vmem:[#allocation2 + $0x2] sm:$0x3] %vm293, %v289
    // Predicated region
    $region18: #{tpu_custom_call.1} parent=1 // pred_check
      %p296 = pneg %p51
    $region19: #{tpu_custom_call.1} parent=1 // pred_check_branch
      %298 = sbr.rel (%p296) target = $region21
    $region20: #{tpu_custom_call.1} parent=1 // pred_region
      %v299 = vld [vmem:[#allocation2] sm:$0x3]
      %v300 = vld [vmem:[#allocation2 + $0x2] sm:$0x3]
      %v303 = vlaneseq
      %v304 = vshrl.u32 %v303, 7
      %v305 = vsub.s32 0, %v304
      %v306 = vrot.slane %v299, %v305
      %v307 = vlaneseq
      %v308 = vshrl.u32 %v307, 7
      %v309 = vsub.s32 1, %v308
      %v310 = vrot.slane %v299, %v309
      %v311 = vlaneseq
      %v312 = vshrl.u32 %v311, 7
      %v313 = vsub.s32 0, %v312
      %v314 = vrot.slane %v300, %v313
      %v315 = vlaneseq
      %v316 = vshrl.u32 %v315, 7
      %v317 = vsub.s32 1, %v316
      %v318 = vrot.slane %v300, %v317
      %vm323 = vcmask 1040384
      %v324 = vsel %vm323, %v306, 0.0
      %v325 = vsel %vm323, %v310, 0.0
      %v326 = vadd.f32 %v324, %v325
      %327 = vadd.xlane.f32.xlu0 %v326
      %v328 = vpop.xlane.xlu0 %327
      %v329 = vsel %vm323, %v314, 0.0
      %v330 = vsel %vm323, %v318, 0.0
      %v331 = vadd.f32 %v329, %v330
      %332 = vadd.xlane.f32.xlu0 %v331
      %v333 = vpop.xlane.xlu0 %332
      %v334 = vmul.f32 %v328, 0.00390625
      %v335 = vmul.f32 %v333, 0.00390625
      %336 = vst [vmem:[#allocation6] sm:$0x1] %v334
      %337 = vst [vmem:[#allocation6 + $0x1] sm:$0x1] %v335
    $region21: #{tpu_custom_call.1} parent=1 // pred_fallthru
      _
    // Predicated region
    $region22: #{tpu_custom_call.1} parent=1 // pred_check
      _
    $region23: #{tpu_custom_call.1} parent=1 // pred_check_branch
      %339 = sbr.rel (0) target = $region25
    $region24: #{tpu_custom_call.1} parent=1 // pred_region
      %s341 = ssub.s32 32, 32
      %342 = vsyncadd [#allocation5], %s341
      %s343 = sshll.u32 [#allocation6], 4
      %s344 = int_to_ptr.vmem [resolvable:$true] %s343
      %349 = dma.vmem_to_hbm [thread:$0]  %s344, 32, %s2, [#allocation5], 16, 16, 1
    $region25: #{tpu_custom_call.1} parent=1 // pred_fallthru
      _
    // Predicated region
    $region26: #{tpu_custom_call.1} parent=1 // pred_check
      _
    $region27: #{tpu_custom_call.1} parent=1 // pred_check_branch
      %351 = sbr.rel (0) target = $region29
    $region28: #{tpu_custom_call.1} parent=1 // pred_region
      %352 = dma.done [#allocation5], 32
    $region29: #{tpu_custom_call.1} parent=1 // pred_fallthru
      _
    %353 = vsyncpa [#allocation4], 1
    %354 = vsyncpa [#allocation5], 1

</llo_original>
